<compile_context>
chip_gen: v7x
topology: tpu7x:2x2x1
jax: 0.10.0
libtpu: 0.0.40
codegen_flags: <defaults>
</compile_context>

<pallas_src>
import jax
import jax.numpy as jnp
from jax.experimental import pallas as pl
from jax.experimental.pallas import tpu as pltpu

# ---- test sizes (small but faithful to the module: hidden=512, out=27) -----
BATCH = 24              # not a tile multiple -> exercises the ragged last block
FEAT_A = 64             # features of patches_A
FEAT_B = 64             # features of patches_B
HIDDEN = 512
OUT = 27
LANE = 128              # lane-dense padded output width
MAX_BLOCK_M = 1024      # batch tile cap (amortizes ~0.35us/step grid overhead)


def _round_up(x, m):
    return ((x + m - 1) // m) * m


def _head_kernel(a_ref, b_ref, w1a_ref, w1b_ref, b1_ref, w2_ref, b2_ref, o_ref):
    # relu(cat(A, B) @ W1 + b1) @ W2 + b2 for one batch tile.
    # A/B arrive as f32 straight from HBM; cast to bf16 in-register so both
    # matmuls run at bf16 MXU rate with f32 accumulation.
    a = a_ref[...].astype(jnp.bfloat16)
    b = b_ref[...].astype(jnp.bfloat16)
    h = jnp.dot(a, w1a_ref[...], preferred_element_type=jnp.float32)
    h = h + jnp.dot(b, w1b_ref[...], preferred_element_type=jnp.float32)
    h = jnp.maximum(h + b1_ref[...], 0.0)            # (1, HIDDEN) broadcasts
    y = jnp.dot(h.astype(jnp.bfloat16), w2_ref[...],
                preferred_element_type=jnp.float32)
    o_ref[...] = (y + b2_ref[...]).astype(o_ref.dtype)


def prepare_rpl_head_params(w1, b1, w2, b2, feat_a):
    """One-time parameter preparation (hoisted out of the per-call path):
    split W1 at the concat boundary, cast weights to bf16, zero-pad the
    27-wide output projection to a lane-dense 128 columns, reshape biases."""
    in_dim, hidden = w1.shape
    assert w2.shape[0] == hidden
    out_dim = w2.shape[1]
    out_pad = _round_up(max(out_dim, LANE), LANE)
    return dict(
        w1a=w1[:feat_a].astype(jnp.bfloat16),
        w1b=w1[feat_a:].astype(jnp.bfloat16),
        b1=b1.reshape(1, hidden).astype(jnp.float32),
        w2=jnp.pad(w2, ((0, 0), (0, out_pad - out_dim))).astype(jnp.bfloat16),
        b2=jnp.pad(b2.reshape(1, out_dim),
                   ((0, 0), (0, out_pad - out_dim))).astype(jnp.float32),
        out_dim=out_dim,
        out_pad=out_pad,
    )


def rpl_head_forward(patches_A, patches_B, params, *, block_m=MAX_BLOCK_M):
    """patches_A: [B, FA] f32, patches_B: [B, FB] f32 -> [B, out_dim] f32."""
    B, fa = patches_A.shape
    fb = patches_B.shape[1]
    hidden = params["w1a"].shape[1]
    out_pad = params["w2"].shape[1]
    out_dim = params["out_dim"]
    assert params["w1a"].shape[0] == fa and params["w1b"].shape[0] == fb

    # Batch tile: multiple of 16 (bf16 sublane packing), capped.  Keep >= 2
    # grid steps when the batch allows it so v7x can shard the parallel axis
    # across its two TensorCores.  No batch padding: grid = cdiv and the
    # ragged last block is handled by Pallas masked writes.
    tm = min(block_m, _round_up(B, 16))
    if B > 16:
        tm = min(tm, _round_up(pl.cdiv(B, 2), 16))
    grid_m = pl.cdiv(B, tm)

    cost = pl.CostEstimate(
        flops=2 * B * ((fa + fb) * hidden + hidden * out_pad),
        transcendentals=0,
        bytes_accessed=(patches_A.size * 4 + patches_B.size * 4
                        + params["w1a"].size * 2 + params["w1b"].size * 2
                        + params["w2"].size * 2
                        + params["b1"].size * 4 + params["b2"].size * 4
                        + B * out_pad * 2),
    )

    out = pl.pallas_call(
        _head_kernel,
        out_shape=jax.ShapeDtypeStruct((B, out_pad), jnp.bfloat16),
        grid_spec=pltpu.PrefetchScalarGridSpec(
            num_scalar_prefetch=0,
            grid=(grid_m,),
            in_specs=[
                pl.BlockSpec((tm, fa), lambda i: (i, 0)),            # A tile
                pl.BlockSpec((tm, fb), lambda i: (i, 0)),            # B tile
                pl.BlockSpec((fa, hidden), lambda i: (0, 0)),        # W1[:fa] resident
                pl.BlockSpec((fb, hidden), lambda i: (0, 0)),        # W1[fa:] resident
                pl.BlockSpec((1, hidden), lambda i: (0, 0)),         # b1 resident
                pl.BlockSpec((hidden, out_pad), lambda i: (0, 0)),   # W2 (padded) resident
                pl.BlockSpec((1, out_pad), lambda i: (0, 0)),        # b2 (padded) resident
            ],
            out_specs=pl.BlockSpec((tm, out_pad), lambda i: (i, 0)),
        ),
        compiler_params=pltpu.CompilerParams(
            dimension_semantics=("parallel",)),
        cost_estimate=cost,
    )(patches_A, patches_B, params["w1a"], params["w1b"], params["b1"],
      params["w2"], params["b2"])

    # bf16 writeback halves the kernel's largest HBM stream; recover f32 on
    # the tiny valid slice only.
    return out[:B, :out_dim].astype(jnp.float32)


def rpl_head_reference(patches_A, patches_B, w1, b1, w2, b2,
                       compute_dtype=jnp.float32):
    x = jnp.concatenate([patches_A, patches_B], axis=1).astype(compute_dtype)
    h = jnp.dot(x, w1.astype(compute_dtype),
                preferred_element_type=jnp.float32) + b1
    h = jnp.maximum(h, 0.0)
    y = jnp.dot(h.astype(compute_dtype), w2.astype(compute_dtype),
                preferred_element_type=jnp.float32) + b2
    return y


if __name__ == "__main__":
    key = jax.random.PRNGKey(0)
    k_a, k_b, k_w1, k_b1, k_w2, k_b2 = jax.random.split(key, 6)

    input_dim = FEAT_A + FEAT_B   # module default is 1024; small here for test
    # Deterministic synthetic parameters (Linear weights stored as [in, out]).
    w1 = jax.random.normal(k_w1, (input_dim, HIDDEN), jnp.float32) * 0.02
    b1 = jax.random.normal(k_b1, (HIDDEN,), jnp.float32) * 0.02
    w2 = jax.random.normal(k_w2, (HIDDEN, OUT), jnp.float32) * 0.02
    b2 = jax.random.normal(k_b2, (OUT,), jnp.float32) * 0.02

    patches_A = jax.random.normal(k_a, (BATCH, FEAT_A), jnp.float32)
    patches_B = jax.random.normal(k_b, (BATCH, FEAT_B), jnp.float32)

    # One-time parameter prep (not in the per-call path).
    params = prepare_rpl_head_params(w1, b1, w2, b2, FEAT_A)

    out = rpl_head_forward(patches_A, patches_B, params)
    out = jax.block_until_ready(out)
    assert out.shape == (BATCH, OUT), out.shape

    # Tight check against a bf16-consistent reference (same rounding points,
    # including the bf16 writeback) ...
    ref_bf16 = rpl_head_reference(patches_A, patches_B, w1, b1, w2, b2,
                                  compute_dtype=jnp.bfloat16)
    ref_bf16 = ref_bf16.astype(jnp.bfloat16).astype(jnp.float32)
    assert jnp.allclose(out, ref_bf16, atol=2e-3, rtol=2e-3), \
        "mismatch vs bf16-consistent reference"

    # ... and a semantic check against the full-f32 reference (bf16 tolerance).
    # TODO(synk): if strict f32 parity is ever required, add an f32 compute
    # path (problem is DMA-bound, so the MXU cost of f32 is negligible).
    ref_f32 = rpl_head_reference(patches_A, patches_B, w1, b1, w2, b2,
                                 compute_dtype=jnp.float32)
    assert jnp.allclose(out, ref_f32, atol=2e-2, rtol=2e-2), \
        "mismatch vs f32 reference"

    print("KERNEL_OK")
</pallas_src>

<mosaic_0001>
module attributes {stable_mosaic.version = 11 : i64} {
  func.func @_head_kernel(%arg0: i32, %arg1: memref<16x64xf32, #tpu.memory_space<vmem>>, %arg2: memref<16x64xf32, #tpu.memory_space<vmem>>, %arg3: memref<64x512xbf16, #tpu.memory_space<vmem>>, %arg4: memref<64x512xbf16, #tpu.memory_space<vmem>>, %arg5: memref<1x512xf32, #tpu.memory_space<vmem>>, %arg6: memref<512x128xbf16, #tpu.memory_space<vmem>>, %arg7: memref<1x128xf32, #tpu.memory_space<vmem>>, %arg8: memref<16x128xbf16, #tpu.memory_space<vmem>>) attributes {dimension_semantics = [#tpu.dimension_semantics<parallel>], iteration_bounds = array<i64: 2>, scalar_prefetch = 0 : i64, scratch_operands = 0 : i64, tpu.core_type = #tpu.core_type<tc>, window_params = [{transform_indices = @transform_0, window_bounds = array<i64: 16, 64>}, {transform_indices = @transform_1, window_bounds = array<i64: 16, 64>}, {pipeline_mode = #tpu.pipeline_mode<synchronous>, transform_indices = @transform_2, window_bounds = array<i64: 64, 512>}, {pipeline_mode = #tpu.pipeline_mode<synchronous>, transform_indices = @transform_3, window_bounds = array<i64: 64, 512>}, {pipeline_mode = #tpu.pipeline_mode<synchronous>, transform_indices = @transform_4, window_bounds = array<i64: 1, 512>}, {pipeline_mode = #tpu.pipeline_mode<synchronous>, transform_indices = @transform_5, window_bounds = array<i64: 512, 128>}, {pipeline_mode = #tpu.pipeline_mode<synchronous>, transform_indices = @transform_6, window_bounds = array<i64: 1, 128>}, {transform_indices = @transform_7, window_bounds = array<i64: 16, 128>}]} {
    %c0 = arith.constant 0 : index
    %c0_0 = arith.constant 0 : index
    %0 = vector.load %arg1[%c0, %c0_0] : memref<16x64xf32, #tpu.memory_space<vmem>>, vector<16x64xf32>
    %1 = arith.truncf %0 : vector<16x64xf32> to vector<16x64xbf16>
    %c0_1 = arith.constant 0 : index
    %c0_2 = arith.constant 0 : index
    %2 = vector.load %arg2[%c0_1, %c0_2] : memref<16x64xf32, #tpu.memory_space<vmem>>, vector<16x64xf32>
    %3 = arith.truncf %2 : vector<16x64xf32> to vector<16x64xbf16>
    %c0_3 = arith.constant 0 : index
    %c0_4 = arith.constant 0 : index
    %4 = vector.load %arg3[%c0_3, %c0_4] : memref<64x512xbf16, #tpu.memory_space<vmem>>, vector<64x512xbf16>
    %cst = arith.constant dense<0.000000e+00> : vector<16x512xf32>
    %5 = tpu.matmul %1, %4, %cst {dimension_numbers = #tpu.dot_dimension_numbers<[1], [0], [0], [1], [0, 0, 1, 1], [], []>} : vector<16x64xbf16>, vector<64x512xbf16>, vector<16x512xf32> -> vector<16x512xf32>
    %c0_5 = arith.constant 0 : index
    %c0_6 = arith.constant 0 : index
    %6 = vector.load %arg4[%c0_5, %c0_6] : memref<64x512xbf16, #tpu.memory_space<vmem>>, vector<64x512xbf16>
    %cst_7 = arith.constant dense<0.000000e+00> : vector<16x512xf32>
    %7 = tpu.matmul %3, %6, %cst_7 {dimension_numbers = #tpu.dot_dimension_numbers<[1], [0], [0], [1], [0, 0, 1, 1], [], []>} : vector<16x64xbf16>, vector<64x512xbf16>, vector<16x512xf32> -> vector<16x512xf32>
    %8 = arith.addf %5, %7 : vector<16x512xf32>
    %c0_8 = arith.constant 0 : index
    %c0_9 = arith.constant 0 : index
    %9 = vector.load %arg5[%c0_8, %c0_9] : memref<1x512xf32, #tpu.memory_space<vmem>>, vector<1x512xf32>
    %10 = vector.broadcast %9 : vector<1x512xf32> to vector<16x512xf32>
    %11 = arith.addf %8, %10 : vector<16x512xf32>
    %cst_10 = arith.constant 0.000000e+00 : f32
    %12 = vector.broadcast %cst_10 : f32 to vector<16x512xf32>
    %13 = arith.maximumf %11, %12 : vector<16x512xf32>
    %14 = arith.truncf %13 : vector<16x512xf32> to vector<16x512xbf16>
    %c0_11 = arith.constant 0 : index
    %c0_12 = arith.constant 0 : index
    %15 = vector.load %arg6[%c0_11, %c0_12] : memref<512x128xbf16, #tpu.memory_space<vmem>>, vector<512x128xbf16>
    %cst_13 = arith.constant dense<0.000000e+00> : vector<16x128xf32>
    %16 = tpu.matmul %14, %15, %cst_13 {dimension_numbers = #tpu.dot_dimension_numbers<[1], [0], [0], [1], [0, 0, 1, 1], [], []>} : vector<16x512xbf16>, vector<512x128xbf16>, vector<16x128xf32> -> vector<16x128xf32>
    %c0_14 = arith.constant 0 : index
    %c0_15 = arith.constant 0 : index
    %17 = vector.load %arg7[%c0_14, %c0_15] : memref<1x128xf32, #tpu.memory_space<vmem>>, vector<1x128xf32>
    %18 = vector.broadcast %17 : vector<1x128xf32> to vector<16x128xf32>
    %19 = arith.addf %16, %18 : vector<16x128xf32>
    %20 = arith.truncf %19 : vector<16x128xf32> to vector<16x128xbf16>
    %c0_16 = arith.constant 0 : index
    %c0_17 = arith.constant 0 : index
    %21 = vector.load %arg8[%c0_16, %c0_17] : memref<16x128xbf16, #tpu.memory_space<vmem>>, vector<16x128xbf16>
    tpu.vector_store %arg8[%c0_16, %c0_17], %20 {strides = array<i32>} : memref<16x128xbf16, #tpu.memory_space<vmem>>, vector<16x128xbf16>,
    return
  }
  func.func @transform_0(%arg0: i32) -> (i32, i32) {
    %c0_i32 = arith.constant 0 : i32
    %c0_i32_0 = arith.constant 0 : i32
    return %arg0, %c0_i32 : i32, i32
  }
  func.func @transform_1(%arg0: i32) -> (i32, i32) {
    %c0_i32 = arith.constant 0 : i32
    %c0_i32_0 = arith.constant 0 : i32
    return %arg0, %c0_i32 : i32, i32
  }
  func.func @transform_2(%arg0: i32) -> (i32, i32) {
    %c0_i32 = arith.constant 0 : i32
    %c0_i32_0 = arith.constant 0 : i32
    %c0_i32_1 = arith.constant 0 : i32
    return %c0_i32, %c0_i32_0 : i32, i32
  }
  func.func @transform_3(%arg0: i32) -> (i32, i32) {
    %c0_i32 = arith.constant 0 : i32
    %c0_i32_0 = arith.constant 0 : i32
    %c0_i32_1 = arith.constant 0 : i32
    return %c0_i32, %c0_i32_0 : i32, i32
  }
  func.func @transform_4(%arg0: i32) -> (i32, i32) {
    %c0_i32 = arith.constant 0 : i32
    %c0_i32_0 = arith.constant 0 : i32
    %c0_i32_1 = arith.constant 0 : i32
    return %c0_i32, %c0_i32_0 : i32, i32
  }
  func.func @transform_5(%arg0: i32) -> (i32, i32) {
    %c0_i32 = arith.constant 0 : i32
    %c0_i32_0 = arith.constant 0 : i32
    %c0_i32_1 = arith.constant 0 : i32
    return %c0_i32, %c0_i32_0 : i32, i32
  }
  func.func @transform_6(%arg0: i32) -> (i32, i32) {
    %c0_i32 = arith.constant 0 : i32
    %c0_i32_0 = arith.constant 0 : i32
    %c0_i32_1 = arith.constant 0 : i32
    return %c0_i32, %c0_i32_0 : i32, i32
  }
  func.func @transform_7(%arg0: i32) -> (i32, i32) {
    %c0_i32 = arith.constant 0 : i32
    %c0_i32_0 = arith.constant 0 : i32
    return %arg0, %c0_i32 : i32, i32
  }
}

</mosaic_0001>

<llo_original>
// kernel: tpu_custom_call.1
$region0: #{tpu_custom_call.1}
  #allocation0 [shape = 'u32[]', space=smem, size = 0x4, offset = 0x4, fixed_abs, tag = 'smem constant byte address 0x4 - core index']
  #allocation1 [shape = 'u32[144,128]{1,0:T(1,128)}', space=vmem, size = 0x12000, scoped, tag = 'internal scratch']
  %s0 = inlined_call_operand.hbm [shape: f32[24,64], index: 0, kind: input, shape index: {}]
  %s1 = inlined_call_operand.hbm [shape: f32[24,64], index: 1, kind: input, shape index: {}]
  %s2 = inlined_call_operand.hbm [shape: bf16[64,512], index: 2, kind: input, shape index: {}]
  %s3 = inlined_call_operand.hbm [shape: bf16[64,512], index: 3, kind: input, shape index: {}]
  %s4 = inlined_call_operand.vmem [shape: f32[1,512], index: 4, kind: input, shape index: {}]
  %s5 = inlined_call_operand.hbm [shape: bf16[512,128], index: 5, kind: input, shape index: {}]
  %s6 = inlined_call_operand.vmem [shape: f32[1,128], index: 6, kind: input, shape index: {}]
  %s7 = inlined_call_operand.hbm [shape: bf16[24,128], index: 7, kind: output, shape index: {}]
  %s8 = sld [smem:[#allocation0]]
  $region81: #{tpu_custom_call.1} parent=0
    _
  %s10 = ssub.s32 1, %s8
  %s11 = scalar_select 0, %s10, %s8
  $region1: #{tpu_custom_call.1} parent=0
    #allocation2 [shape = 'u8[16384]{0}', space=vmem, size = 0x4000, scoped, tag = 'input window, operand 0']
    #allocation3 [shape = 's32[2]{0}', space=sflag, size = 0x8, scoped, tag = 'scoped memory for tpu_custom_call.1']
    #allocation4 [shape = 's32[2]{0}', space=sflag, size = 0x8, scoped, tag = 'scoped memory for tpu_custom_call.1']
    #allocation5 [shape = 'u8[16384]{0}', space=vmem, size = 0x4000, scoped, tag = 'input window, operand 1']
    #allocation6 [shape = 's32[2]{0}', space=sflag, size = 0x8, scoped, tag = 'scoped memory for tpu_custom_call.1']
    #allocation7 [shape = 'u8[65536]{0}', space=vmem, size = 0x10000, scoped, tag = 'input window, operand 2, single buffered']
    #allocation8 [shape = 'u8[65536]{0}', space=vmem, size = 0x10000, scoped, tag = 'input window, operand 3, single buffered']
    #allocation9 [shape = 's32[1]{0}', space=sflag, size = 0x4, scoped, tag = 'scoped memory for tpu_custom_call.1']
    #allocation10 [shape = 'u8[131072]{0}', space=vmem, size = 0x20000, scoped, tag = 'input window, operand 5, single buffered']
    #allocation11 [shape = 'u8[8192]{0}', space=vmem, size = 0x2000, scoped, tag = 'output window, operand 0']
    %12 = vsyncpa [#allocation3], 0
    %s13 = scalar_lea.sflag [#allocation3], 1
    %14 = vsyncpa %s13, 0
    %15 = vsyncpa [#allocation6], 0
    %s16 = scalar_lea.sflag [#allocation6], 1
    %17 = vsyncpa %s16, 0
    %18 = vsyncpa [#allocation9], 0
    %19 = vsyncpa [#allocation4], 0
    %s20 = scalar_lea.sflag [#allocation4], 1
    %21 = vsyncpa %s20, 0
    loop: start=0, step=1, limit=4
    $region2: #{tpu_custom_call.1} parent=1 // loop_pre_header
      _
    $region3: #{tpu_custom_call.1} parent=1 // loop_header
      %s23 = sphi 0, %s27
      %p24 = scmp.ge.s32.totalorder %s23, 4
      %s33 = sphi 0, %s35
      %s36 = sphi 0, %s33
      %s37 = sphi 0, %s36
      %s53 = sphi 0, %s37
      %s59 = sphi 0, %s61
      %s62 = sphi 0, %s59
      %s63 = sphi 0, %s62
      %s79 = sphi 0, %s63
      %s83 = sphi 0, %s83
      %s85 = sphi 0, %s83
      %s86 = sphi 0, %s85
      %s100 = sphi 0, %s86
      %s104 = sphi 0, %s104
      %s106 = sphi 0, %s104
      %s107 = sphi 0, %s106
      %s121 = sphi 0, %s107
      %s125 = sphi 0, %s125
      %s127 = sphi 0, %s125
      %s128 = sphi 0, %s127
      %s142 = sphi 0, %s128
      %s146 = sphi 0, %s146
      %s148 = sphi 0, %s146
      %s149 = sphi 0, %s148
      %s163 = sphi 0, %s149
      %s167 = sphi 0, %s167
      %s169 = sphi 0, %s167
      %s170 = sphi 0, %s169
      %s184 = sphi 0, %s170
      %s190 = sphi 0, %s192
      %s193 = sphi 0, %s190
      %s194 = sphi 0, %s193
      %s210 = sphi 0, %s194
    $region4: #{tpu_custom_call.1} parent=1 // loop_header_branch
      %26 = sbr.rel (%p24) target = $region8
    $region5: #{tpu_custom_call.1} parent=1 // loop_body
      %s28 = ssub.s32 %s23, 1
      %s29 = ssub.s32 %s23, 2
      %s30 = sadd.s32 %s23, 1
      %s31 = ssub.s32 %s23, %s30
      %p32 = scmp.eq.s32.totalorder %s31, 0
      %s34 = sadd.s32 %s33, 1
      %s35 = scalar_select %p32, %s33, %s34
      %p38 = pneg %p32
      %p39 = scmp.eq.s32.totalorder %s23, 1
      %p40 = por %p38, %p39
      %p41 = scmp.ne.s32.totalorder %s33, %s36
      %p42 = scmp.eq.s32.totalorder %s23, 0
      %p43 = por %p41, %p42
      %p44 = scmp.ne.s32.totalorder %s33, %s36
      %p45 = scmp.eq.s32.totalorder %s28, 1
      %p46 = por %p44, %p45
      %p47 = scmp.ne.s32.totalorder %s36, %s37
      %p48 = scmp.eq.s32.totalorder %s28, 0
      %p49 = por %p47, %p48
      %p50 = scmp.ne.s32.totalorder %s36, %s37
      %p51 = scmp.eq.s32.totalorder %s29, 1
      %p52 = por %p50, %p51
      %p54 = scmp.ne.s32.totalorder %s37, %s53
      %p55 = scmp.eq.s32.totalorder %s29, 0
      %p56 = por %p54, %p55
      %s57 = ssub.s32 %s23, %s30
      %p58 = scmp.eq.s32.totalorder %s57, 0
      %s60 = sadd.s32 %s59, 1
      %s61 = scalar_select %p58, %s59, %s60
      %p64 = pneg %p58
      %p65 = scmp.eq.s32.totalorder %s23, 1
      %p66 = por %p64, %p65
      %p67 = scmp.ne.s32.totalorder %s59, %s62
      %p68 = scmp.eq.s32.totalorder %s23, 0
      %p69 = por %p67, %p68
      %p70 = scmp.ne.s32.totalorder %s59, %s62
      %p71 = scmp.eq.s32.totalorder %s28, 1
      %p72 = por %p70, %p71
      %p73 = scmp.ne.s32.totalorder %s62, %s63
      %p74 = scmp.eq.s32.totalorder %s28, 0
      %p75 = por %p73, %p74
      %p76 = scmp.ne.s32.totalorder %s62, %s63
      %p77 = scmp.eq.s32.totalorder %s29, 1
      %p78 = por %p76, %p77
      %p80 = scmp.ne.s32.totalorder %s63, %s79
      %p81 = scmp.eq.s32.totalorder %s29, 0
      %p82 = por %p80, %p81
      %s84 = sadd.s32 %s83, 1
      %p87 = scmp.eq.s32.totalorder %s23, 1
      %p88 = scmp.ne.s32.totalorder %s83, %s85
      %p89 = scmp.eq.s32.totalorder %s23, 0
      %p90 = por %p88, %p89
      %p91 = scmp.ne.s32.totalorder %s83, %s85
      %p92 = scmp.eq.s32.totalorder %s28, 1
      %p93 = por %p91, %p92
      %p94 = scmp.ne.s32.totalorder %s85, %s86
      %p95 = scmp.eq.s32.totalorder %s28, 0
      %p96 = por %p94, %p95
      %p97 = scmp.ne.s32.totalorder %s85, %s86
      %p98 = scmp.eq.s32.totalorder %s29, 1
      %p99 = por %p97, %p98
      %p101 = scmp.ne.s32.totalorder %s86, %s100
      %p102 = scmp.eq.s32.totalorder %s29, 0
      %p103 = por %p101, %p102
      %s105 = sadd.s32 %s104, 1
      %p108 = scmp.eq.s32.totalorder %s23, 1
      %p109 = scmp.ne.s32.totalorder %s104, %s106
      %p110 = scmp.eq.s32.totalorder %s23, 0
      %p111 = por %p109, %p110
      %p112 = scmp.ne.s32.totalorder %s104, %s106
      %p113 = scmp.eq.s32.totalorder %s28, 1
      %p114 = por %p112, %p113
      %p115 = scmp.ne.s32.totalorder %s106, %s107
      %p116 = scmp.eq.s32.totalorder %s28, 0
      %p117 = por %p115, %p116
      %p118 = scmp.ne.s32.totalorder %s106, %s107
      %p119 = scmp.eq.s32.totalorder %s29, 1
      %p120 = por %p118, %p119
      %p122 = scmp.ne.s32.totalorder %s107, %s121
      %p123 = scmp.eq.s32.totalorder %s29, 0
      %p124 = por %p122, %p123
      %s126 = sadd.s32 %s125, 1
      %p129 = scmp.eq.s32.totalorder %s23, 1
      %p130 = scmp.ne.s32.totalorder %s125, %s127
      %p131 = scmp.eq.s32.totalorder %s23, 0
      %p132 = por %p130, %p131
      %p133 = scmp.ne.s32.totalorder %s125, %s127
      %p134 = scmp.eq.s32.totalorder %s28, 1
      %p135 = por %p133, %p134
      %p136 = scmp.ne.s32.totalorder %s127, %s128
      %p137 = scmp.eq.s32.totalorder %s28, 0
      %p138 = por %p136, %p137
      %p139 = scmp.ne.s32.totalorder %s127, %s128
      %p140 = scmp.eq.s32.totalorder %s29, 1
      %p141 = por %p139, %p140
      %p143 = scmp.ne.s32.totalorder %s128, %s142
      %p144 = scmp.eq.s32.totalorder %s29, 0
      %p145 = por %p143, %p144
      %s147 = sadd.s32 %s146, 1
      %p150 = scmp.eq.s32.totalorder %s23, 1
      %p151 = scmp.ne.s32.totalorder %s146, %s148
      %p152 = scmp.eq.s32.totalorder %s23, 0
      %p153 = por %p151, %p152
      %p154 = scmp.ne.s32.totalorder %s146, %s148
      %p155 = scmp.eq.s32.totalorder %s28, 1
      %p156 = por %p154, %p155
      %p157 = scmp.ne.s32.totalorder %s148, %s149
      %p158 = scmp.eq.s32.totalorder %s28, 0
      %p159 = por %p157, %p158
      %p160 = scmp.ne.s32.totalorder %s148, %s149
      %p161 = scmp.eq.s32.totalorder %s29, 1
      %p162 = por %p160, %p161
      %p164 = scmp.ne.s32.totalorder %s149, %s163
      %p165 = scmp.eq.s32.totalorder %s29, 0
      %p166 = por %p164, %p165
      %s168 = sadd.s32 %s167, 1
      %p171 = scmp.eq.s32.totalorder %s23, 1
      %p172 = scmp.ne.s32.totalorder %s167, %s169
      %p173 = scmp.eq.s32.totalorder %s23, 0
      %p174 = por %p172, %p173
      %p175 = scmp.ne.s32.totalorder %s167, %s169
      %p176 = scmp.eq.s32.totalorder %s28, 1
      %p177 = por %p175, %p176
      %p178 = scmp.ne.s32.totalorder %s169, %s170
      %p179 = scmp.eq.s32.totalorder %s28, 0
      %p180 = por %p178, %p179
      %p181 = scmp.ne.s32.totalorder %s169, %s170
      %p182 = scmp.eq.s32.totalorder %s29, 1
      %p183 = por %p181, %p182
      %p185 = scmp.ne.s32.totalorder %s170, %s184
      %p186 = scmp.eq.s32.totalorder %s29, 0
      %p187 = por %p185, %p186
      %s188 = ssub.s32 %s23, %s30
      %p189 = scmp.eq.s32.totalorder %s188, 0
      %s191 = sadd.s32 %s190, 1
      %s192 = scalar_select %p189, %s190, %s191
      %p195 = pneg %p189
      %p196 = scmp.eq.s32.totalorder %s23, 1
      %p197 = por %p195, %p196
      %p198 = scmp.ne.s32.totalorder %s190, %s193
      %p199 = scmp.eq.s32.totalorder %s23, 0
      %p200 = por %p198, %p199
      %p201 = scmp.ne.s32.totalorder %s190, %s193
      %p202 = scmp.eq.s32.totalorder %s28, 1
      %p203 = por %p201, %p202
      %p204 = scmp.ne.s32.totalorder %s193, %s194
      %p205 = scmp.eq.s32.totalorder %s28, 0
      %p206 = por %p204, %p205
      %p207 = scmp.ne.s32.totalorder %s193, %s194
      %p208 = scmp.eq.s32.totalorder %s29, 1
      %p209 = por %p207, %p208
      %p211 = scmp.ne.s32.totalorder %s194, %s210
      %p212 = scmp.eq.s32.totalorder %s29, 0
      %p213 = por %p211, %p212
      %p214 = scmp.le.s32.totalorder 1, %s23
      %p215 = scmp.lt.s32.totalorder %s23, 3
      %p216 = pnand %p214, %p215
      %p217 = pneg %p216
      // Predicated region
      $region9: #{tpu_custom_call.1} parent=5 // pred_check
        _
      $region10: #{tpu_custom_call.1} parent=5 // pred_check_branch
        %219 = sbr.rel (%p216) target = $region12
      $region11: #{tpu_custom_call.1} parent=5 // pred_region
        %s220 = ssub.s32 %s23, 1
        // Predicated region
        $region13: #{tpu_custom_call.1} parent=11 // pred_check
          %p221 = pneg %p96
        $region14: #{tpu_custom_call.1} parent=11 // pred_check_branch
          %223 = sbr.rel (%p221) target = $region16
        $region15: #{tpu_custom_call.1} parent=11 // pred_region
          %s225 = ssub.s32 2048, 2048
          %226 = vsyncadd [#allocation6], %s225
          %s227 = sshll.u32 [#allocation7], 4
          %s228 = int_to_ptr.vmem [resolvable:$true] %s227
          %233 = dma.hbm_to_vmem [thread:$0]  %s2, 2048, %s228, [#allocation6], 256, 256, 16
        $region16: #{tpu_custom_call.1} parent=11 // pred_fallthru
          _
        // Predicated region
        $region17: #{tpu_custom_call.1} parent=11 // pred_check
          %p234 = pneg %p117
        $region18: #{tpu_custom_call.1} parent=11 // pred_check_branch
          %236 = sbr.rel (%p234) target = $region20
        $region19: #{tpu_custom_call.1} parent=11 // pred_region
          %s238 = ssub.s32 2048, 2048
          %239 = vsyncadd [#allocation9], %s238
          %s240 = sshll.u32 [#allocation8], 4
          %s241 = int_to_ptr.vmem [resolvable:$true] %s240
          %246 = dma.hbm_to_vmem [thread:$0]  %s3, 2048, %s241, [#allocation9], 256, 256, 16
        $region20: #{tpu_custom_call.1} parent=11 // pred_fallthru
          _
        // Predicated region
        $region21: #{tpu_custom_call.1} parent=11 // pred_check
          %p247 = pneg %p138
        $region22: #{tpu_custom_call.1} parent=11 // pred_check_branch
          %249 = sbr.rel (%p247) target = $region24
        $region23: #{tpu_custom_call.1} parent=11 // pred_region
          _
        $region24: #{tpu_custom_call.1} parent=11 // pred_fallthru
          _
        // Predicated region
        $region25: #{tpu_custom_call.1} parent=11 // pred_check
          %p250 = pneg %p159
        $region26: #{tpu_custom_call.1} parent=11 // pred_check_branch
          %252 = sbr.rel (%p250) target = $region28
        $region27: #{tpu_custom_call.1} parent=11 // pred_region
          %s254 = ssub.s32 4096, 4096
          %255 = vsyncadd [#allocation9], %s254
          %s256 = sshll.u32 [#allocation10], 4
          %s257 = int_to_ptr.vmem [resolvable:$true] %s256
          %262 = dma.hbm_to_vmem [thread:$0]  %s5, 4096, %s257, [#allocation9], 64, 64, 4
        $region28: #{tpu_custom_call.1} parent=11 // pred_fallthru
          _
        // Predicated region
        $region29: #{tpu_custom_call.1} parent=11 // pred_check
          %p263 = pneg %p180
        $region30: #{tpu_custom_call.1} parent=11 // pred_check_branch
          %265 = sbr.rel (%p263) target = $region32
        $region31: #{tpu_custom_call.1} parent=11 // pred_region
          _
        $region32: #{tpu_custom_call.1} parent=11 // pred_fallthru
          _
      $region12: #{tpu_custom_call.1} parent=5 // pred_fallthru
        _
      %p266 = scmp.lt.s32.totalorder %s23, 2
      // Predicated region
      $region33: #{tpu_custom_call.1} parent=5 // pred_check
        %p267 = pneg %p266
      $region34: #{tpu_custom_call.1} parent=5 // pred_check_branch
        %269 = sbr.rel (%p267) target = $region36
      $region35: #{tpu_custom_call.1} parent=5 // pred_region
        // Predicated region
        $region37: #{tpu_custom_call.1} parent=35 // pred_check
          %p270 = pneg %p43
        $region38: #{tpu_custom_call.1} parent=35 // pred_check_branch
          %272 = sbr.rel (%p270) target = $region40
        $region39: #{tpu_custom_call.1} parent=35 // pred_region
          %s273 = sand.u32 %s33, 1
          %s274 = scalar_lea.sflag [#allocation3], %s273
          %s275 = sand.u32 %s33, 1
          %s276 = smul.addr %s275, 16
          %s277 = scalar_lea.vmem [#allocation2], %s276
          %s278 = smul.u32 2, %s23
          %s279 = ssub.s32 3, %s278
          %p280 = scmp.lt.s32.totalorder %s279, 2
          %s281 = scalar_select %p280, %s279, 2
          %s282 = smul.u32 128, %s281
          %s284 = ssub.s32 256, %s282
          %285 = vsyncadd %s274, %s284
          %p286 = scmp.ne.s32.totalorder 0, %s282
          %s287 = smul.addr %s278, 128
          %s288 = scalar_lea.hbm %s0, %s287
          %s289 = smul.u32 8, %s281
          %s290 = sshll.u32 %s277, 4
          %s291 = int_to_ptr.vmem [resolvable:$true] %s290
          %s292 = sshll.u32 %s289, 4
          %296 = dma.hbm_to_vmem [thread:$0]  (%p286), %s288, %s292, %s291, %s274, 128, 128, 8
        $region40: #{tpu_custom_call.1} parent=35 // pred_fallthru
          _
        // Predicated region
        $region41: #{tpu_custom_call.1} parent=35 // pred_check
          %p297 = pneg %p69
        $region42: #{tpu_custom_call.1} parent=35 // pred_check_branch
          %299 = sbr.rel (%p297) target = $region44
        $region43: #{tpu_custom_call.1} parent=35 // pred_region
          %s300 = sand.u32 %s23, 1
          %s301 = scalar_lea.sflag [#allocation6], %s300
          %s302 = sand.u32 %s59, 1
          %s303 = smul.addr %s302, 16
          %s304 = scalar_lea.vmem [#allocation5], %s303
          %s305 = smul.u32 2, %s23
          %s306 = ssub.s32 3, %s305
          %p307 = scmp.lt.s32.totalorder %s306, 2
          %s308 = scalar_select %p307, %s306, 2
          %s309 = smul.u32 128, %s308
          %s311 = ssub.s32 256, %s309
          %312 = vsyncadd %s301, %s311
          %p313 = scmp.ne.s32.totalorder 0, %s309
          %s314 = smul.addr %s305, 128
          %s315 = scalar_lea.hbm %s1, %s314
          %s316 = smul.u32 8, %s308
          %s317 = sshll.u32 %s304, 4
          %s318 = int_to_ptr.vmem [resolvable:$true] %s317
          %s319 = sshll.u32 %s316, 4
          %323 = dma.hbm_to_vmem [thread:$0]  (%p313), %s315, %s319, %s318, %s301, 128, 128, 8
        $region44: #{tpu_custom_call.1} parent=35 // pred_fallthru
          _
      $region36: #{tpu_custom_call.1} parent=5 // pred_fallthru
        _
      %p324 = scmp.le.s32.totalorder 1, %s23
      %p325 = scmp.lt.s32.totalorder %s23, 3
      %p326 = pnand %p324, %p325
      %p327 = pneg %p326
      // Predicated region
      $region45: #{tpu_custom_call.1} parent=5 // pred_check
        _
      $region46: #{tpu_custom_call.1} parent=5 // pred_check_branch
        %329 = sbr.rel (%p326) target = $region48
      $region47: #{tpu_custom_call.1} parent=5 // pred_region
        %s330 = ssub.s32 %s23, 1
        %s331 = sand.u32 %s36, 1
        %s332 = scalar_lea.sflag [#allocation3], %s331
        %s333 = sand.u32 %s36, 1
        %s334 = smul.addr %s333, 16
        %s335 = scalar_lea.vmem [#allocation2], %s334
        // Predicated region
        $region49: #{tpu_custom_call.1} parent=47 // pred_check
          %p336 = pneg %p49
        $region50: #{tpu_custom_call.1} parent=47 // pred_check_branch
          %338 = sbr.rel (%p336) target = $region52
        $region51: #{tpu_custom_call.1} parent=47 // pred_region
          %339 = dma.done %s332, 256
        $region52: #{tpu_custom_call.1} parent=47 // pred_fallthru
          _
        %s340 = sand.u32 %s28, 1
        %s341 = scalar_lea.sflag [#allocation6], %s340
        %s342 = sand.u32 %s62, 1
        %s343 = smul.addr %s342, 16
        %s344 = scalar_lea.vmem [#allocation5], %s343
        // Predicated region
        $region53: #{tpu_custom_call.1} parent=47 // pred_check
          %p345 = pneg %p75
        $region54: #{tpu_custom_call.1} parent=47 // pred_check_branch
          %347 = sbr.rel (%p345) target = $region56
        $region55: #{tpu_custom_call.1} parent=47 // pred_region
          %348 = dma.done %s341, 256
        $region56: #{tpu_custom_call.1} parent=47 // pred_fallthru
          _
        // Predicated region
        $region57: #{tpu_custom_call.1} parent=47 // pred_check
          %p349 = pneg %p96
        $region58: #{tpu_custom_call.1} parent=47 // pred_check_branch
          %351 = sbr.rel (%p349) target = $region60
        $region59: #{tpu_custom_call.1} parent=47 // pred_region
          %352 = dma.done [#allocation6], 2048
        $region60: #{tpu_custom_call.1} parent=47 // pred_fallthru
          _
        // Predicated region
        $region61: #{tpu_custom_call.1} parent=47 // pred_check
          %p353 = pneg %p117
        $region62: #{tpu_custom_call.1} parent=47 // pred_check_branch
          %355 = sbr.rel (%p353) target = $region64
        $region63: #{tpu_custom_call.1} parent=47 // pred_region
          %356 = dma.done [#allocation9], 2048
        $region64: #{tpu_custom_call.1} parent=47 // pred_fallthru
          _
        // Predicated region
        $region65: #{tpu_custom_call.1} parent=47 // pred_check
          %p357 = pneg %p159
        $region66: #{tpu_custom_call.1} parent=47 // pred_check_branch
          %359 = sbr.rel (%p357) target = $region68
        $region67: #{tpu_custom_call.1} parent=47 // pred_region
          %360 = dma.done [#allocation9], 4096
        $region68: #{tpu_custom_call.1} parent=47 // pred_fallthru
          _
        %s361 = sand.u32 %s36, 1
        %s362 = scalar_lea.sflag [#allocation3], %s361
        %s363 = sand.u32 %s36, 1
        %s364 = smul.addr %s363, 16
        %s365 = scalar_lea.vmem [#allocation2], %s364
        %p366 = pneg %p49
        %p367 = pneg %p46
        %s368 = sand.u32 %s28, 1
        %s369 = scalar_lea.sflag [#allocation6], %s368
        %s370 = sand.u32 %s62, 1
        %s371 = smul.addr %s370, 16
        %s372 = scalar_lea.vmem [#allocation5], %s371
        %p373 = pneg %p75
        %p374 = pneg %p72
        %p375 = pneg %p96
        %p376 = pneg %p93
        %p377 = pneg %p117
        %p378 = pneg %p114
        %p379 = pneg %p138
        %p380 = pneg %p135
        %p381 = pneg %p159
        %p382 = pneg %p156
        %p383 = pneg %p180
        %p384 = pneg %p177
        %p385 = pneg %p206
        %p386 = pneg %p203
        %s387 = sand.u32 %s193, 1
        %s388 = scalar_lea.sflag [#allocation4], %s387
        %s389 = sand.u32 %s193, 1
        %s390 = smul.addr %s389, 8
        %s391 = scalar_lea.vmem [#allocation11], %s390
        %s392 = smul.u32 2, %s28
        %s393 = ssub.s32 3, %s392
        %p394 = scmp.lt.s32.totalorder %s393, 2
        %s395 = scalar_select %p394, %s393, 2
        %s396 = smul.u32 128, %s395
        %s397 = smul.u32 2, %s28
        %s398 = ssub.s32 3, %s397
        %p399 = scmp.lt.s32.totalorder %s398, 2
        %s400 = scalar_select %p399, %s398, 2
        %s401 = smul.u32 128, %s400
        %s402 = smul.u32 2, %s28
        %s403 = ssub.s32 3, %s402
        %p404 = scmp.lt.s32.totalorder %s403, 2
        %s405 = scalar_select %p404, %s403, 2
        %s406 = smul.u32 64, %s405
        %v408 = vld [vmem:[%s335] sm:$0xff]
        %v409 = vld [vmem:[%s335 + $0x8] sm:$0xff]
        %v410 = vpack.c.bf16 %v409, %v408
        %v411 = vld [vmem:[%s344] sm:$0xff]
        %v412 = vld [vmem:[%s344 + $0x8] sm:$0xff]
        %v413 = vpack.c.bf16 %v412, %v411
        %v414 = vld [vmem:[#allocation7] sm:$0xff]
        %v415 = vld [vmem:[#allocation7 + $0x8] sm:$0xff]
        %v416 = vld [vmem:[#allocation7 + $0x10] sm:$0xff]
        %v417 = vld [vmem:[#allocation7 + $0x18] sm:$0xff]
        %v418 = vld [vmem:[#allocation7 + $0x20] sm:$0xff]
        %v419 = vld [vmem:[#allocation7 + $0x28] sm:$0xff]
        %v420 = vld [vmem:[#allocation7 + $0x30] sm:$0xff]
        %v421 = vld [vmem:[#allocation7 + $0x38] sm:$0xff]
        %v422 = vld [vmem:[#allocation7 + $0x40] sm:$0xff]
        %v423 = vld [vmem:[#allocation7 + $0x48] sm:$0xff]
        %v424 = vld [vmem:[#allocation7 + $0x50] sm:$0xff]
        %v425 = vld [vmem:[#allocation7 + $0x58] sm:$0xff]
        %v426 = vld [vmem:[#allocation7 + $0x60] sm:$0xff]
        %v427 = vld [vmem:[#allocation7 + $0x68] sm:$0xff]
        %v428 = vld [vmem:[#allocation7 + $0x70] sm:$0xff]
        %v429 = vld [vmem:[#allocation7 + $0x78] sm:$0xff]
        %v430 = vld [vmem:[#allocation8] sm:$0xff]
        %v431 = vld [vmem:[#allocation8 + $0x8] sm:$0xff]
        %v432 = vld [vmem:[#allocation8 + $0x10] sm:$0xff]
        %v433 = vld [vmem:[#allocation8 + $0x18] sm:$0xff]
        %v434 = vld [vmem:[#allocation8 + $0x20] sm:$0xff]
        %v435 = vld [vmem:[#allocation8 + $0x28] sm:$0xff]
        %v436 = vld [vmem:[#allocation8 + $0x30] sm:$0xff]
        %v437 = vld [vmem:[#allocation8 + $0x38] sm:$0xff]
        %v438 = vld [vmem:[#allocation8 + $0x40] sm:$0xff]
        %v439 = vld [vmem:[#allocation8 + $0x48] sm:$0xff]
        %v440 = vld [vmem:[#allocation8 + $0x50] sm:$0xff]
        %v441 = vld [vmem:[#allocation8 + $0x58] sm:$0xff]
        %v442 = vld [vmem:[#allocation8 + $0x60] sm:$0xff]
        %v443 = vld [vmem:[#allocation8 + $0x68] sm:$0xff]
        %v444 = vld [vmem:[#allocation8 + $0x70] sm:$0xff]
        %v445 = vld [vmem:[#allocation8 + $0x78] sm:$0xff]
        %v462 = vunpack.c.l.b16 %v430
        %v463 = vunpack.c.h.b16 %v430
        %v464 = vunpack.c.l.b16 %v431
        %v465 = vunpack.c.h.b16 %v431
        %v466 = vunpack.c.l.b16 %v432
        %v467 = vunpack.c.h.b16 %v432
        %v468 = vunpack.c.l.b16 %v433
        %v469 = vunpack.c.h.b16 %v433
        %v470 = vunpack.c.l.b16 %v434
        %v471 = vunpack.c.h.b16 %v434
        %v472 = vunpack.c.l.b16 %v435
        %v473 = vunpack.c.h.b16 %v435
        %v474 = vunpack.c.l.b16 %v436
        %v475 = vunpack.c.h.b16 %v436
        %v476 = vunpack.c.l.b16 %v437
        %v477 = vunpack.c.h.b16 %v437
        %v478 = vunpack.c.l.b16 %v438
        %v479 = vunpack.c.h.b16 %v438
        %v480 = vunpack.c.l.b16 %v439
        %v481 = vunpack.c.h.b16 %v439
        %v482 = vunpack.c.l.b16 %v440
        %v483 = vunpack.c.h.b16 %v440
        %v484 = vunpack.c.l.b16 %v441
        %v485 = vunpack.c.h.b16 %v441
        %v486 = vunpack.c.l.b16 %v442
        %v487 = vunpack.c.h.b16 %v442
        %v488 = vunpack.c.l.b16 %v443
        %v489 = vunpack.c.h.b16 %v443
        %v490 = vunpack.c.l.b16 %v444
        %v491 = vunpack.c.h.b16 %v444
        %v492 = vunpack.c.l.b16 %v445
        %v493 = vunpack.c.h.b16 %v445
        %v494 = vpack.c.b16 %v466, %v462
        %v495 = vpack.c.b16 %v467, %v463
        %v496 = vpack.c.b16 %v468, %v464
        %v497 = vpack.c.b16 %v469, %v465
        %v498 = vpack.c.b16 %v474, %v470
        %v499 = vpack.c.b16 %v475, %v471
        %v500 = vpack.c.b16 %v476, %v472
        %v501 = vpack.c.b16 %v477, %v473
        %v502 = vpack.c.b16 %v482, %v478
        %v503 = vpack.c.b16 %v483, %v479
        %v504 = vpack.c.b16 %v484, %v480
        %v505 = vpack.c.b16 %v485, %v481
        %v506 = vpack.c.b16 %v490, %v486
        %v507 = vpack.c.b16 %v491, %v487
        %v508 = vpack.c.b16 %v492, %v488
        %v509 = vpack.c.b16 %v493, %v489
        %vm526 = vcmask 523264
        %v528 = vsel %vm526, %v413, 0
        %530 = vmatprep.subr.bf16.mxu0 %v495
        %531 = vmatpush1.bf16.msra.mxu0 %v494
        %532 = vmatprep.subr.bf16.mxu0 %v499
        %533 = vmatpush1.bf16.msra.mxu0 %v498
        %534 = vmatprep.subr.bf16.mxu0 %v503
        %535 = vmatpush1.bf16.msra.mxu0 %v502
        %536 = vmatprep.subr.bf16.mxu0 %v507
        %537 = vmatpush1.bf16.msra.mxu0 %v506
        %538 = vmatprep.subr.bf16.mxu0 0
        %539 = vmatpush1.bf16.msra.mxu0 0
        %540 = vmatprep.subr.bf16.mxu0 0
        %541 = vmatpush1.bf16.msra.mxu0 0
        %542 = vmatprep.subr.bf16.mxu0 0
        %543 = vmatpush1.bf16.msra.mxu0 0
        %544 = vmatprep.subr.bf16.mxu0 0
        %545 = vmatpush1.bf16.msra.mxu0 0
        %546 = vmatprep.subr.bf16.mxu0 0
        %547 = vmatpush1.bf16.msra.mxu0 0
        %548 = vmatprep.subr.bf16.mxu0 0
        %549 = vmatpush1.bf16.msra.mxu0 0
        %550 = vmatprep.subr.bf16.mxu0 0
        %551 = vmatpush1.bf16.msra.mxu0 0
        %552 = vmatprep.subr.bf16.mxu0 0
        %553 = vmatpush1.bf16.msra.mxu0 0
        %554 = vmatprep.subr.bf16.mxu0 0
        %555 = vmatpush1.bf16.msra.mxu0 0
        %556 = vmatprep.subr.bf16.mxu0 0
        %557 = vmatpush1.bf16.msra.mxu0 0
        %558 = vmatprep.subr.bf16.mxu0 0
        %559 = vmatpush1.bf16.msra.mxu0 0
        %560 = vmatprep.subr.bf16.mxu0 0
        %561 = vmatpush1.bf16.msra.mxu0 0
        %562 = vmatprep.mubr.bf16.mxu0 0
        %563 = vmatmul.mubr.bf16.gmra.mrb[0].mxu0 %v528
        %v564 = vpop.f32.mrb[0].mxu0
        %v565 = vadd.f32 0.0, %v564
        %v566 = vpop.f32.mrb[0].mxu0
        %v567 = vadd.f32 0.0, %v566
        %v568 = vpop.f32.mrb[0].mxu0
        %v569 = vadd.f32 0.0, %v568
        %v570 = vpop.f32.mrb[0].mxu0
        %v571 = vadd.f32 0.0, %v570
        %572 = vdwg.mxu0
        %573 = vmatprep.subr.bf16.mxu0 %v497
        %574 = vmatpush1.bf16.msra.mxu0 %v496
        %575 = vmatprep.subr.bf16.mxu0 %v501
        %576 = vmatpush1.bf16.msra.mxu0 %v500
        %577 = vmatprep.subr.bf16.mxu0 %v505
        %578 = vmatpush1.bf16.msra.mxu0 %v504
        %579 = vmatprep.subr.bf16.mxu0 %v509
        %580 = vmatpush1.bf16.msra.mxu0 %v508
        %581 = vmatprep.subr.bf16.mxu0 0
        %582 = vmatpush1.bf16.msra.mxu0 0
        %583 = vmatprep.subr.bf16.mxu0 0
        %584 = vmatpush1.bf16.msra.mxu0 0
        %585 = vmatprep.subr.bf16.mxu0 0
        %586 = vmatpush1.bf16.msra.mxu0 0
        %587 = vmatprep.subr.bf16.mxu0 0
        %588 = vmatpush1.bf16.msra.mxu0 0
        %589 = vmatprep.subr.bf16.mxu0 0
        %590 = vmatpush1.bf16.msra.mxu0 0
        %591 = vmatprep.subr.bf16.mxu0 0
        %592 = vmatpush1.bf16.msra.mxu0 0
        %593 = vmatprep.subr.bf16.mxu0 0
        %594 = vmatpush1.bf16.msra.mxu0 0
        %595 = vmatprep.subr.bf16.mxu0 0
        %596 = vmatpush1.bf16.msra.mxu0 0
        %597 = vmatprep.subr.bf16.mxu0 0
        %598 = vmatpush1.bf16.msra.mxu0 0
        %599 = vmatprep.subr.bf16.mxu0 0
        %600 = vmatpush1.bf16.msra.mxu0 0
        %601 = vmatprep.subr.bf16.mxu0 0
        %602 = vmatpush1.bf16.msra.mxu0 0
        %603 = vmatprep.subr.bf16.mxu0 0
        %604 = vmatpush1.bf16.msra.mxu0 0
        %605 = vmatprep.mubr.bf16.mxu0 0
        %606 = vmatmul.mubr.bf16.gmra.mrb[0].mxu0 %v528
        %v607 = vpop.f32.mrb[0].mxu0
        %v608 = vadd.f32 0.0, %v607
        %v609 = vpop.f32.mrb[0].mxu0
        %v610 = vadd.f32 0.0, %v609
        %v611 = vpop.f32.mrb[0].mxu0
        %v612 = vadd.f32 0.0, %v611
        %v613 = vpop.f32.mrb[0].mxu0
        %v614 = vadd.f32 0.0, %v613
        %615 = vdwg.mxu0
        %v632 = vunpack.c.l.b16 %v414
        %v633 = vunpack.c.h.b16 %v414
        %v634 = vunpack.c.l.b16 %v415
        %v635 = vunpack.c.h.b16 %v415
        %v636 = vunpack.c.l.b16 %v416
        %v637 = vunpack.c.h.b16 %v416
        %v638 = vunpack.c.l.b16 %v417
        %v639 = vunpack.c.h.b16 %v417
        %v640 = vunpack.c.l.b16 %v418
        %v641 = vunpack.c.h.b16 %v418
        %v642 = vunpack.c.l.b16 %v419
        %v643 = vunpack.c.h.b16 %v419
        %v644 = vunpack.c.l.b16 %v420
        %v645 = vunpack.c.h.b16 %v420
        %v646 = vunpack.c.l.b16 %v421
        %v647 = vunpack.c.h.b16 %v421
        %v648 = vunpack.c.l.b16 %v422
        %v649 = vunpack.c.h.b16 %v422
        %v650 = vunpack.c.l.b16 %v423
        %v651 = vunpack.c.h.b16 %v423
        %v652 = vunpack.c.l.b16 %v424
        %v653 = vunpack.c.h.b16 %v424
        %v654 = vunpack.c.l.b16 %v425
        %v655 = vunpack.c.h.b16 %v425
        %v656 = vunpack.c.l.b16 %v426
        %v657 = vunpack.c.h.b16 %v426
        %v658 = vunpack.c.l.b16 %v427
        %v659 = vunpack.c.h.b16 %v427
        %v660 = vunpack.c.l.b16 %v428
        %v661 = vunpack.c.h.b16 %v428
        %v662 = vunpack.c.l.b16 %v429
        %v663 = vunpack.c.h.b16 %v429
        %v664 = vpack.c.b16 %v636, %v632
        %v665 = vpack.c.b16 %v637, %v633
        %v666 = vpack.c.b16 %v638, %v634
        %v667 = vpack.c.b16 %v639, %v635
        %v668 = vpack.c.b16 %v644, %v640
        %v669 = vpack.c.b16 %v645, %v641
        %v670 = vpack.c.b16 %v646, %v642
        %v671 = vpack.c.b16 %v647, %v643
        %v672 = vpack.c.b16 %v652, %v648
        %v673 = vpack.c.b16 %v653, %v649
        %v674 = vpack.c.b16 %v654, %v650
        %v675 = vpack.c.b16 %v655, %v651
        %v676 = vpack.c.b16 %v660, %v656
        %v677 = vpack.c.b16 %v661, %v657
        %v678 = vpack.c.b16 %v662, %v658
        %v679 = vpack.c.b16 %v663, %v659
        %v697 = vsel %vm526, %v410, 0
        %699 = vmatprep.subr.bf16.mxu0 %v665
        %700 = vmatpush1.bf16.msra.mxu0 %v664
        %701 = vmatprep.subr.bf16.mxu0 %v669
        %702 = vmatpush1.bf16.msra.mxu0 %v668
        %703 = vmatprep.subr.bf16.mxu0 %v673
        %704 = vmatpush1.bf16.msra.mxu0 %v672
        %705 = vmatprep.subr.bf16.mxu0 %v677
        %706 = vmatpush1.bf16.msra.mxu0 %v676
        %707 = vmatprep.subr.bf16.mxu0 0
        %708 = vmatpush1.bf16.msra.mxu0 0
        %709 = vmatprep.subr.bf16.mxu0 0
        %710 = vmatpush1.bf16.msra.mxu0 0
        %711 = vmatprep.subr.bf16.mxu0 0
        %712 = vmatpush1.bf16.msra.mxu0 0
        %713 = vmatprep.subr.bf16.mxu0 0
        %714 = vmatpush1.bf16.msra.mxu0 0
        %715 = vmatprep.subr.bf16.mxu0 0
        %716 = vmatpush1.bf16.msra.mxu0 0
        %717 = vmatprep.subr.bf16.mxu0 0
        %718 = vmatpush1.bf16.msra.mxu0 0
        %719 = vmatprep.subr.bf16.mxu0 0
        %720 = vmatpush1.bf16.msra.mxu0 0
        %721 = vmatprep.subr.bf16.mxu0 0
        %722 = vmatpush1.bf16.msra.mxu0 0
        %723 = vmatprep.subr.bf16.mxu0 0
        %724 = vmatpush1.bf16.msra.mxu0 0
        %725 = vmatprep.subr.bf16.mxu0 0
        %726 = vmatpush1.bf16.msra.mxu0 0
        %727 = vmatprep.subr.bf16.mxu0 0
        %728 = vmatpush1.bf16.msra.mxu0 0
        %729 = vmatprep.subr.bf16.mxu0 0
        %730 = vmatpush1.bf16.msra.mxu0 0
        %731 = vmatprep.mubr.bf16.mxu0 0
        %732 = vmatmul.mubr.bf16.gmra.mrb[0].mxu0 %v697
        %v733 = vpop.f32.mrb[0].mxu0
        %v734 = vadd.f32 %v565, %v733
        %v735 = vpop.f32.mrb[0].mxu0
        %v736 = vadd.f32 %v567, %v735
        %v737 = vpop.f32.mrb[0].mxu0
        %v738 = vadd.f32 %v569, %v737
        %v739 = vpop.f32.mrb[0].mxu0
        %v740 = vadd.f32 %v571, %v739
        %741 = vdwg.mxu0
        %742 = vmatprep.subr.bf16.mxu0 %v667
        %743 = vmatpush1.bf16.msra.mxu0 %v666
        %744 = vmatprep.subr.bf16.mxu0 %v671
        %745 = vmatpush1.bf16.msra.mxu0 %v670
        %746 = vmatprep.subr.bf16.mxu0 %v675
        %747 = vmatpush1.bf16.msra.mxu0 %v674
        %748 = vmatprep.subr.bf16.mxu0 %v679
        %749 = vmatpush1.bf16.msra.mxu0 %v678
        %750 = vmatprep.subr.bf16.mxu0 0
        %751 = vmatpush1.bf16.msra.mxu0 0
        %752 = vmatprep.subr.bf16.mxu0 0
        %753 = vmatpush1.bf16.msra.mxu0 0
        %754 = vmatprep.subr.bf16.mxu0 0
        %755 = vmatpush1.bf16.msra.mxu0 0
        %756 = vmatprep.subr.bf16.mxu0 0
        %757 = vmatpush1.bf16.msra.mxu0 0
        %758 = vmatprep.subr.bf16.mxu0 0
        %759 = vmatpush1.bf16.msra.mxu0 0
        %760 = vmatprep.subr.bf16.mxu0 0
        %761 = vmatpush1.bf16.msra.mxu0 0
        %762 = vmatprep.subr.bf16.mxu0 0
        %763 = vmatpush1.bf16.msra.mxu0 0
        %764 = vmatprep.subr.bf16.mxu0 0
        %765 = vmatpush1.bf16.msra.mxu0 0
        %766 = vmatprep.subr.bf16.mxu0 0
        %767 = vmatpush1.bf16.msra.mxu0 0
        %768 = vmatprep.subr.bf16.mxu0 0
        %769 = vmatpush1.bf16.msra.mxu0 0
        %770 = vmatprep.subr.bf16.mxu0 0
        %771 = vmatpush1.bf16.msra.mxu0 0
        %772 = vmatprep.subr.bf16.mxu0 0
        %773 = vmatpush1.bf16.msra.mxu0 0
        %774 = vmatprep.mubr.bf16.mxu0 0
        %775 = vmatmul.mubr.bf16.gmra.mrb[0].mxu0 %v697
        %v776 = vpop.f32.mrb[0].mxu0
        %v777 = vadd.f32 %v608, %v776
        %v778 = vpop.f32.mrb[0].mxu0
        %v779 = vadd.f32 %v610, %v778
        %v780 = vpop.f32.mrb[0].mxu0
        %v781 = vadd.f32 %v612, %v780
        %v782 = vpop.f32.mrb[0].mxu0
        %v783 = vadd.f32 %v614, %v782
        %784 = vdwg.mxu0
        %v785 = vld [vmem:[%s4] sm:$0xf]
        %v787 = vlaneseq
        %v788 = vshrl.u32 %v787, 7
        %v789 = vsub.s32 0, %v788
        %v790 = vrot.slane %v785, %v789
        %v791 = vlaneseq
        %v792 = vshrl.u32 %v791, 7
        %v793 = vsub.s32 1, %v792
        %v794 = vrot.slane %v785, %v793
        %v795 = vlaneseq
        %v796 = vshrl.u32 %v795, 7
        %v797 = vsub.s32 2, %v796
        %v798 = vrot.slane %v785, %v797
        %v799 = vlaneseq
        %v800 = vshrl.u32 %v799, 7
        %v801 = vsub.s32 3, %v800
        %v802 = vrot.slane %v785, %v801
        %v807 = vadd.f32 %v734, %v790
        %v808 = vadd.f32 %v736, %v794
        %v809 = vadd.f32 %v777, %v798
        %v810 = vadd.f32 %v779, %v802
        %v811 = vadd.f32 %v738, %v790
        %v812 = vadd.f32 %v740, %v794
        %v813 = vadd.f32 %v781, %v798
        %v814 = vadd.f32 %v783, %v802
        %v815 = vmax.f32 %v807, 0.0
        %v816 = vmax.f32 %v808, 0.0
        %v817 = vmax.f32 %v809, 0.0
        %v818 = vmax.f32 %v810, 0.0
        %v819 = vmax.f32 %v811, 0.0
        %v820 = vmax.f32 %v812, 0.0
        %v821 = vmax.f32 %v813, 0.0
        %v822 = vmax.f32 %v814, 0.0
        %v823 = vpack.c.bf16 %v819, %v815
        %v824 = vpack.c.bf16 %v820, %v816
        %v825 = vpack.c.bf16 %v821, %v817
        %v826 = vpack.c.bf16 %v822, %v818
        %v827 = vld [vmem:[#allocation10] sm:$0xf]
        %v828 = vld [vmem:[#allocation10 + $0x4] sm:$0xf]
        %v829 = vld [vmem:[#allocation10 + $0x8] sm:$0xf]
        %v830 = vld [vmem:[#allocation10 + $0xc] sm:$0xf]
        %v831 = vld [vmem:[#allocation10 + $0x10] sm:$0xf]
        %v832 = vld [vmem:[#allocation10 + $0x14] sm:$0xf]
        %v833 = vld [vmem:[#allocation10 + $0x18] sm:$0xf]
        %v834 = vld [vmem:[#allocation10 + $0x1c] sm:$0xf]
        %v835 = vld [vmem:[#allocation10 + $0x20] sm:$0xf]
        %v836 = vld [vmem:[#allocation10 + $0x24] sm:$0xf]
        %v837 = vld [vmem:[#allocation10 + $0x28] sm:$0xf]
        %v838 = vld [vmem:[#allocation10 + $0x2c] sm:$0xf]
        %v839 = vld [vmem:[#allocation10 + $0x30] sm:$0xf]
        %v840 = vld [vmem:[#allocation10 + $0x34] sm:$0xf]
        %v841 = vld [vmem:[#allocation10 + $0x38] sm:$0xf]
        %v842 = vld [vmem:[#allocation10 + $0x3c] sm:$0xf]
        %v843 = vld [vmem:[#allocation10 + $0x40] sm:$0xf]
        %v844 = vld [vmem:[#allocation10 + $0x44] sm:$0xf]
        %v845 = vld [vmem:[#allocation10 + $0x48] sm:$0xf]
        %v846 = vld [vmem:[#allocation10 + $0x4c] sm:$0xf]
        %v847 = vld [vmem:[#allocation10 + $0x50] sm:$0xf]
        %v848 = vld [vmem:[#allocation10 + $0x54] sm:$0xf]
        %v849 = vld [vmem:[#allocation10 + $0x58] sm:$0xf]
        %v850 = vld [vmem:[#allocation10 + $0x5c] sm:$0xf]
        %v851 = vld [vmem:[#allocation10 + $0x60] sm:$0xf]
        %v852 = vld [vmem:[#allocation10 + $0x64] sm:$0xf]
        %v853 = vld [vmem:[#allocation10 + $0x68] sm:$0xf]
        %v854 = vld [vmem:[#allocation10 + $0x6c] sm:$0xf]
        %v855 = vld [vmem:[#allocation10 + $0x70] sm:$0xf]
        %v856 = vld [vmem:[#allocation10 + $0x74] sm:$0xf]
        %v857 = vld [vmem:[#allocation10 + $0x78] sm:$0xf]
        %v858 = vld [vmem:[#allocation10 + $0x7c] sm:$0xf]
        %v859 = vld [vmem:[#allocation10 + $0x80] sm:$0xf]
        %v860 = vld [vmem:[#allocation10 + $0x84] sm:$0xf]
        %v861 = vld [vmem:[#allocation10 + $0x88] sm:$0xf]
        %v862 = vld [vmem:[#allocation10 + $0x8c] sm:$0xf]
        %v863 = vld [vmem:[#allocation10 + $0x90] sm:$0xf]
        %v864 = vld [vmem:[#allocation10 + $0x94] sm:$0xf]
        %v865 = vld [vmem:[#allocation10 + $0x98] sm:$0xf]
        %v866 = vld [vmem:[#allocation10 + $0x9c] sm:$0xf]
        %v867 = vld [vmem:[#allocation10 + $0xa0] sm:$0xf]
        %v868 = vld [vmem:[#allocation10 + $0xa4] sm:$0xf]
        %v869 = vld [vmem:[#allocation10 + $0xa8] sm:$0xf]
        %v870 = vld [vmem:[#allocation10 + $0xac] sm:$0xf]
        %v871 = vld [vmem:[#allocation10 + $0xb0] sm:$0xf]
        %v872 = vld [vmem:[#allocation10 + $0xb4] sm:$0xf]
        %v873 = vld [vmem:[#allocation10 + $0xb8] sm:$0xf]
        %v874 = vld [vmem:[#allocation10 + $0xbc] sm:$0xf]
        %v875 = vld [vmem:[#allocation10 + $0xc0] sm:$0xf]
        %v876 = vld [vmem:[#allocation10 + $0xc4] sm:$0xf]
        %v877 = vld [vmem:[#allocation10 + $0xc8] sm:$0xf]
        %v878 = vld [vmem:[#allocation10 + $0xcc] sm:$0xf]
        %v879 = vld [vmem:[#allocation10 + $0xd0] sm:$0xf]
        %v880 = vld [vmem:[#allocation10 + $0xd4] sm:$0xf]
        %v881 = vld [vmem:[#allocation10 + $0xd8] sm:$0xf]
        %v882 = vld [vmem:[#allocation10 + $0xdc] sm:$0xf]
        %v883 = vld [vmem:[#allocation10 + $0xe0] sm:$0xf]
        %v884 = vld [vmem:[#allocation10 + $0xe4] sm:$0xf]
        %v885 = vld [vmem:[#allocation10 + $0xe8] sm:$0xf]
        %v886 = vld [vmem:[#allocation10 + $0xec] sm:$0xf]
        %v887 = vld [vmem:[#allocation10 + $0xf0] sm:$0xf]
        %v888 = vld [vmem:[#allocation10 + $0xf4] sm:$0xf]
        %v889 = vld [vmem:[#allocation10 + $0xf8] sm:$0xf]
        %v890 = vld [vmem:[#allocation10 + $0xfc] sm:$0xf]
        %v891 = vld [vmem:[%s6] sm:$0x1]
        %v893 = vlaneseq
        %v894 = vshrl.u32 %v893, 7
        %v895 = vsub.s32 0, %v894
        %v896 = vrot.slane %v891, %v895
        %v962 = vunpack.c.l.b16 %v827
        %v963 = vunpack.c.l.b16 %v828
        %v964 = vunpack.c.l.b16 %v829
        %v965 = vunpack.c.l.b16 %v830
        %v966 = vunpack.c.l.b16 %v831
        %v967 = vunpack.c.l.b16 %v832
        %v968 = vunpack.c.l.b16 %v833
        %v969 = vunpack.c.l.b16 %v834
        %v970 = vunpack.c.l.b16 %v835
        %v971 = vunpack.c.l.b16 %v836
        %v972 = vunpack.c.l.b16 %v837
        %v973 = vunpack.c.l.b16 %v838
        %v974 = vunpack.c.l.b16 %v839
        %v975 = vunpack.c.l.b16 %v840
        %v976 = vunpack.c.l.b16 %v841
        %v977 = vunpack.c.l.b16 %v842
        %v978 = vunpack.c.l.b16 %v843
        %v979 = vunpack.c.l.b16 %v844
        %v980 = vunpack.c.l.b16 %v845
        %v981 = vunpack.c.l.b16 %v846
        %v982 = vunpack.c.l.b16 %v847
        %v983 = vunpack.c.l.b16 %v848
        %v984 = vunpack.c.l.b16 %v849
        %v985 = vunpack.c.l.b16 %v850
        %v986 = vunpack.c.l.b16 %v851
        %v987 = vunpack.c.l.b16 %v852
        %v988 = vunpack.c.l.b16 %v853
        %v989 = vunpack.c.l.b16 %v854
        %v990 = vunpack.c.l.b16 %v855
        %v991 = vunpack.c.l.b16 %v856
        %v992 = vunpack.c.l.b16 %v857
        %v993 = vunpack.c.l.b16 %v858
        %v994 = vunpack.c.l.b16 %v859
        %v995 = vunpack.c.l.b16 %v860
        %v996 = vunpack.c.l.b16 %v861
        %v997 = vunpack.c.l.b16 %v862
        %v998 = vunpack.c.l.b16 %v863
        %v999 = vunpack.c.l.b16 %v864
        %v1000 = vunpack.c.l.b16 %v865
        %v1001 = vunpack.c.l.b16 %v866
        %v1002 = vunpack.c.l.b16 %v867
        %v1003 = vunpack.c.l.b16 %v868
        %v1004 = vunpack.c.l.b16 %v869
        %v1005 = vunpack.c.l.b16 %v870
        %v1006 = vunpack.c.l.b16 %v871
        %v1007 = vunpack.c.l.b16 %v872
        %v1008 = vunpack.c.l.b16 %v873
        %v1009 = vunpack.c.l.b16 %v874
        %v1010 = vunpack.c.l.b16 %v875
        %v1011 = vunpack.c.l.b16 %v876
        %v1012 = vunpack.c.l.b16 %v877
        %v1013 = vunpack.c.l.b16 %v878
        %v1014 = vunpack.c.l.b16 %v879
        %v1015 = vunpack.c.l.b16 %v880
        %v1016 = vunpack.c.l.b16 %v881
        %v1017 = vunpack.c.l.b16 %v882
        %v1018 = vunpack.c.l.b16 %v883
        %v1019 = vunpack.c.l.b16 %v884
        %v1020 = vunpack.c.l.b16 %v885
        %v1021 = vunpack.c.l.b16 %v886
        %v1022 = vunpack.c.l.b16 %v887
        %v1023 = vunpack.c.l.b16 %v888
        %v1024 = vunpack.c.l.b16 %v889
        %v1025 = vunpack.c.l.b16 %v890
        %v1026 = vpack.c.b16 %v963, %v962
        %v1027 = vpack.c.b16 %v965, %v964
        %v1028 = vpack.c.b16 %v967, %v966
        %v1029 = vpack.c.b16 %v969, %v968
        %v1030 = vpack.c.b16 %v971, %v970
        %v1031 = vpack.c.b16 %v973, %v972
        %v1032 = vpack.c.b16 %v975, %v974
        %v1033 = vpack.c.b16 %v977, %v976
        %v1034 = vpack.c.b16 %v979, %v978
        %v1035 = vpack.c.b16 %v981, %v980
        %v1036 = vpack.c.b16 %v983, %v982
        %v1037 = vpack.c.b16 %v985, %v984
        %v1038 = vpack.c.b16 %v987, %v986
        %v1039 = vpack.c.b16 %v989, %v988
        %v1040 = vpack.c.b16 %v991, %v990
        %v1041 = vpack.c.b16 %v993, %v992
        %v1042 = vpack.c.b16 %v995, %v994
        %v1043 = vpack.c.b16 %v997, %v996
        %v1044 = vpack.c.b16 %v999, %v998
        %v1045 = vpack.c.b16 %v1001, %v1000
        %v1046 = vpack.c.b16 %v1003, %v1002
        %v1047 = vpack.c.b16 %v1005, %v1004
        %v1048 = vpack.c.b16 %v1007, %v1006
        %v1049 = vpack.c.b16 %v1009, %v1008
        %v1050 = vpack.c.b16 %v1011, %v1010
        %v1051 = vpack.c.b16 %v1013, %v1012
        %v1052 = vpack.c.b16 %v1015, %v1014
        %v1053 = vpack.c.b16 %v1017, %v1016
        %v1054 = vpack.c.b16 %v1019, %v1018
        %v1055 = vpack.c.b16 %v1021, %v1020
        %v1056 = vpack.c.b16 %v1023, %v1022
        %v1057 = vpack.c.b16 %v1025, %v1024
        %1090 = vmatprep.subr.bf16.mxu0 0
        %1091 = vmatpush1.bf16.msra.mxu0 %v1026
        %1092 = vmatprep.subr.bf16.mxu0 0
        %1093 = vmatpush1.bf16.msra.mxu0 %v1027
        %1094 = vmatprep.subr.bf16.mxu0 0
        %1095 = vmatpush1.bf16.msra.mxu0 %v1028
        %1096 = vmatprep.subr.bf16.mxu0 0
        %1097 = vmatpush1.bf16.msra.mxu0 %v1029
        %1098 = vmatprep.subr.bf16.mxu0 0
        %1099 = vmatpush1.bf16.msra.mxu0 %v1030
        %1100 = vmatprep.subr.bf16.mxu0 0
        %1101 = vmatpush1.bf16.msra.mxu0 %v1031
        %1102 = vmatprep.subr.bf16.mxu0 0
        %1103 = vmatpush1.bf16.msra.mxu0 %v1032
        %1104 = vmatprep.subr.bf16.mxu0 0
        %1105 = vmatpush1.bf16.msra.mxu0 %v1033
        %1106 = vmatprep.subr.bf16.mxu0 0
        %1107 = vmatpush1.bf16.msra.mxu0 %v1034
        %1108 = vmatprep.subr.bf16.mxu0 0
        %1109 = vmatpush1.bf16.msra.mxu0 %v1035
        %1110 = vmatprep.subr.bf16.mxu0 0
        %1111 = vmatpush1.bf16.msra.mxu0 %v1036
        %1112 = vmatprep.subr.bf16.mxu0 0
        %1113 = vmatpush1.bf16.msra.mxu0 %v1037
        %1114 = vmatprep.subr.bf16.mxu0 0
        %1115 = vmatpush1.bf16.msra.mxu0 %v1038
        %1116 = vmatprep.subr.bf16.mxu0 0
        %1117 = vmatpush1.bf16.msra.mxu0 %v1039
        %1118 = vmatprep.subr.bf16.mxu0 0
        %1119 = vmatpush1.bf16.msra.mxu0 %v1040
        %1120 = vmatprep.subr.bf16.mxu0 0
        %1121 = vmatpush1.bf16.msra.mxu0 %v1041
        %1122 = vmatprep.mubr.bf16.mxu0 %v824
        %1123 = vmatmul.mubr.bf16.gmra.mrb[0].mxu0 %v823
        %v1124 = vpop.f32.mrb[0].mxu0
        %v1125 = vadd.f32 %v896, %v1124
        %v1126 = vpop.f32.mrb[0].mxu0
        %v1127 = vpop.f32.mrb[0].mxu0
        %v1128 = vadd.f32 %v896, %v1127
        %v1129 = vpop.f32.mrb[0].mxu0
        %1130 = vdwg.mxu0
        %1131 = vmatprep.subr.bf16.mxu0 0
        %1132 = vmatpush1.bf16.msra.mxu0 %v1042
        %1133 = vmatprep.subr.bf16.mxu0 0
        %1134 = vmatpush1.bf16.msra.mxu0 %v1043
        %1135 = vmatprep.subr.bf16.mxu0 0
        %1136 = vmatpush1.bf16.msra.mxu0 %v1044
        %1137 = vmatprep.subr.bf16.mxu0 0
        %1138 = vmatpush1.bf16.msra.mxu0 %v1045
        %1139 = vmatprep.subr.bf16.mxu0 0
        %1140 = vmatpush1.bf16.msra.mxu0 %v1046
        %1141 = vmatprep.subr.bf16.mxu0 0
        %1142 = vmatpush1.bf16.msra.mxu0 %v1047
        %1143 = vmatprep.subr.bf16.mxu0 0
        %1144 = vmatpush1.bf16.msra.mxu0 %v1048
        %1145 = vmatprep.subr.bf16.mxu0 0
        %1146 = vmatpush1.bf16.msra.mxu0 %v1049
        %1147 = vmatprep.subr.bf16.mxu0 0
        %1148 = vmatpush1.bf16.msra.mxu0 %v1050
        %1149 = vmatprep.subr.bf16.mxu0 0
        %1150 = vmatpush1.bf16.msra.mxu0 %v1051
        %1151 = vmatprep.subr.bf16.mxu0 0
        %1152 = vmatpush1.bf16.msra.mxu0 %v1052
        %1153 = vmatprep.subr.bf16.mxu0 0
        %1154 = vmatpush1.bf16.msra.mxu0 %v1053
        %1155 = vmatprep.subr.bf16.mxu0 0
        %1156 = vmatpush1.bf16.msra.mxu0 %v1054
        %1157 = vmatprep.subr.bf16.mxu0 0
        %1158 = vmatpush1.bf16.msra.mxu0 %v1055
        %1159 = vmatprep.subr.bf16.mxu0 0
        %1160 = vmatpush1.bf16.msra.mxu0 %v1056
        %1161 = vmatprep.subr.bf16.mxu0 0
        %1162 = vmatpush1.bf16.msra.mxu0 %v1057
        %1163 = vmatprep.mubr.bf16.mxu0 %v826
        %1164 = vmatmul.mubr.bf16.gmra.mrb[0].mxu0 %v825
        %v1165 = vpop.f32.mrb[0].mxu0
        %v1166 = vadd.f32 %v1125, %v1165
        %v1167 = vpop.f32.mrb[0].mxu0
        %v1168 = vpop.f32.mrb[0].mxu0
        %v1169 = vadd.f32 %v1128, %v1168
        %v1170 = vpop.f32.mrb[0].mxu0
        %1171 = vdwg.mxu0
        %v1172 = vpack.c.bf16 %v1169, %v1166
        %v1174 = vunpack.c.l.b16 %v1172
        %v1175 = vunpack.c.h.b16 %v1172
        %v1176 = vpack.c.b16 %v1174, %v1174
        %v1177 = vpack.c.b16 %v1175, %v1175
        %1180 = vst [vmem:[%s391] sm:$0xf] %v1176
        %1181 = vst [vmem:[%s391 + $0x4] sm:$0xf] %v1177
        %s1182 = sand.u32 %s193, 1
        %s1183 = scalar_lea.sflag [#allocation4], %s1182
        %s1184 = sand.u32 %s193, 1
        %s1185 = smul.addr %s1184, 8
        %s1186 = scalar_lea.vmem [#allocation11], %s1185
        // Predicated region
        $region69: #{tpu_custom_call.1} parent=47 // pred_check
          %p1187 = pneg %p203
        $region70: #{tpu_custom_call.1} parent=47 // pred_check_branch
          %1189 = sbr.rel (%p1187) target = $region72
        $region71: #{tpu_custom_call.1} parent=47 // pred_region
          %s1190 = smul.u32 2, %s28
          %s1191 = ssub.s32 3, %s1190
          %p1192 = scmp.lt.s32.totalorder %s1191, 2
          %s1193 = scalar_select %p1192, %s1191, 2
          %s1194 = smul.u32 64, %s1193
          %s1196 = ssub.s32 128, %s1194
          %1197 = vsyncadd %s1183, %s1196
          %p1198 = scmp.ne.s32.totalorder 0, %s1194
          %s1199 = smul.addr %s1190, 64
          %s1200 = scalar_lea.hbm %s7, %s1199
          %s1201 = smul.u32 4, %s1193
          %s1202 = sshll.u32 %s1186, 4
          %s1203 = int_to_ptr.vmem [resolvable:$true] %s1202
          %s1204 = sshll.u32 %s1201, 4
          %1208 = dma.vmem_to_hbm [thread:$0]  (%p1198), %s1203, %s1204, %s1200, %s1183, 64, 64, 4
        $region72: #{tpu_custom_call.1} parent=47 // pred_fallthru
          _
      $region48: #{tpu_custom_call.1} parent=5 // pred_fallthru
        _
      %p1209 = scmp.le.s32.totalorder 2, %s23
      // Predicated region
      $region73: #{tpu_custom_call.1} parent=5 // pred_check
        %p1210 = pneg %p1209
      $region74: #{tpu_custom_call.1} parent=5 // pred_check_branch
        %1212 = sbr.rel (%p1210) target = $region76
      $region75: #{tpu_custom_call.1} parent=5 // pred_region
        %s1213 = ssub.s32 %s23, 2
        // Predicated region
        $region77: #{tpu_custom_call.1} parent=75 // pred_check
          %p1214 = pneg %p209
        $region78: #{tpu_custom_call.1} parent=75 // pred_check_branch
          %1216 = sbr.rel (%p1214) target = $region80
        $region79: #{tpu_custom_call.1} parent=75 // pred_region
          %s1217 = sand.u32 %s194, 1
          %s1218 = scalar_lea.sflag [#allocation4], %s1217
          %s1219 = sand.u32 %s194, 1
          %s1220 = smul.addr %s1219, 8
          %s1221 = scalar_lea.vmem [#allocation11], %s1220
          %1222 = dma.done %s1218, 128
        $region80: #{tpu_custom_call.1} parent=75 // pred_fallthru
          _
      $region76: #{tpu_custom_call.1} parent=5 // pred_fallthru
        _
    $region6: #{tpu_custom_call.1} parent=1 // loop_footer
      %s27 = sadd.s32 1, %s23
    $region7: #{tpu_custom_call.1} parent=1 // loop_footer_branch
      %22 = sbr.rel target = $region3
    $region8: #{tpu_custom_call.1} parent=1 // loop_exit
      _
    %1223 = vsyncpa [#allocation3], 1
    %s1224 = scalar_lea.sflag [#allocation3], 1
    %1225 = vsyncpa %s1224, 1
    %1226 = vsyncpa [#allocation6], 1
    %s1227 = scalar_lea.sflag [#allocation6], 1
    %1228 = vsyncpa %s1227, 1
    %1229 = vsyncpa [#allocation9], 1
    %1230 = vsyncpa [#allocation4], 1
    %s1231 = scalar_lea.sflag [#allocation4], 1
    %1232 = vsyncpa %s1231, 1

</llo_original>
